<compile_context>
chip_gen: v5e
topology: v5e:2x2
jax: 0.10.0
libtpu: 0.0.40
codegen_flags: <defaults>
</compile_context>

<pallas_src>
import functools

import jax
import jax.numpy as jnp
from jax.experimental import pallas as pl
from jax.experimental.pallas import tpu as pltpu


def _mlp_qf_kernel(n_hidden, compute_dtype, x_ref, w0_ref, b0_ref, *refs):
    """MLP forward for one (BT, Din) batch tile.

    refs = [w1, b1, ..., w_{n_hidden-1}, b_{n_hidden-1}, w_last_row, b_last, out_ref]
    """
    out_ref = refs[-1]
    b_last_ref = refs[-2]
    w_last_ref = refs[-3]

    # Layer 0: single fused matmul over the pre-concatenated (state|action) tile.
    x = jnp.dot(x_ref[...], w0_ref[...], preferred_element_type=jnp.float32)
    x = jnp.maximum(x + b0_ref[...], 0.0)                 # bias + ReLU in f32

    # Hidden layers 1 .. n_hidden-1 (ReLU on every hidden layer).
    for l in range(n_hidden - 1):
        w = refs[2 * l][...]
        b = refs[2 * l + 1][...]
        x = jnp.dot(x.astype(compute_dtype), w, preferred_element_type=jnp.float32)
        x = jnp.maximum(x + b, 0.0)

    # Final (hidden -> 1) layer as a lane reduce on the VPU/XLU (skip a skinny matmul).
    y = jnp.sum(x * w_last_ref[...], axis=-1, keepdims=True) + b_last_ref[...]
    out_ref[...] = y.astype(out_ref.dtype)


def _round_up(x, m):
    return (x + m - 1) // m * m


def _vmem_capacity_bytes():
    """Physical per-core VMEM; conservative v7x default if the query is unavailable."""
    try:
        return int(pltpu.get_tpu_info().vmem_capacity_bytes)
    except Exception:
        return 64 * 1024 * 1024


def _choose_tile(B, Din, Hp, in_itemsize, block_batch, vmem_budget, resident_bytes):
    """Largest batch tile (multiple of 16 sublanes) that fits the VMEM budget."""
    # Per-row cost: double-buffered input tile + output tile + ~live f32 activations.
    per_row = 2 * Din * in_itemsize + 2 * 4 + 3 * Hp * 4
    avail = vmem_budget - 2 * resident_bytes - (2 << 20)   # weights are double-buffered
    cap = max(16, avail // per_row)
    bt = max(16, (min(block_batch, cap) // 16) * 16)
    # Don't over-tile small batches; give v7x's two TensorCores >= 2 grid steps.
    bt = min(bt, _round_up(B, 16))
    if B >= 32:
        bt = min(bt, _round_up(pl.cdiv(B, 2), 16))
    return bt


def mlp_qf_forward(state, action, weights, biases, *, block_batch=8192,
                   compute_dtype=jnp.bfloat16):
    """state: (B, state_dim), action: (B, action_dim). Returns (B,) f32 Q-values.

    Weights are stored transposed relative to PyTorch, i.e. (in_features, out_features)."""
    assert len(weights) == len(biases) and len(weights) >= 2
    n_hidden = len(weights) - 1
    B, Ds = state.shape
    Da = action.shape[1]
    Din = Ds + Da
    H = weights[0].shape[1]
    Hp = _round_up(H, 128)          # lane-dense hidden width (weights resident -> free)

    # Generation-aware VMEM budget / compiler limit.
    if _vmem_capacity_bytes() >= 128 * 1024 * 1024:         # v5e / v6e
        vmem_limit = 64 * 1024 * 1024
    else:                                                    # v7x (64 MiB physical)
        vmem_limit = 48 * 1024 * 1024
    vmem_budget = vmem_limit - 8 * 1024 * 1024

    # --- Resident parameters: pad hidden dim to Hp once, cast MXU operands to bf16. ---
    w0 = jnp.pad(weights[0], ((0, 0), (0, Hp - H))).astype(compute_dtype)
    b0 = jnp.pad(biases[0], (0, Hp - H)).reshape(1, Hp).astype(jnp.float32)
    params = [w0, b0]
    for l in range(1, n_hidden):
        params.append(jnp.pad(weights[l], ((0, Hp - H), (0, Hp - H))).astype(compute_dtype))
        params.append(jnp.pad(biases[l], (0, Hp - H)).reshape(1, Hp).astype(jnp.float32))
    params.append(jnp.pad(weights[-1][:, 0], (0, Hp - H)).reshape(1, Hp).astype(jnp.float32))
    params.append(biases[-1].reshape(1, 1).astype(jnp.float32))
    resident_bytes = sum(int(p.size) * p.dtype.itemsize for p in params)

    # --- Batch tile / padding. ---
    in_itemsize = jnp.dtype(compute_dtype).itemsize
    BT = _choose_tile(B, Din, Hp, in_itemsize, block_batch, vmem_budget, resident_bytes)
    B_pad = _round_up(B, BT)
    grid = (B_pad // BT,)

    # Single fused concat+pad+cast staging array (written once by one XLA fusion):
    # the kernel streams one (BT, Din) bf16 tile per grid step.
    x = jnp.concatenate([state, action], axis=-1)
    if B_pad != B:
        x = jnp.pad(x, ((0, B_pad - B), (0, 0)))
    x = x.astype(compute_dtype)

    args = [x] + params

    in_specs = [pl.BlockSpec((BT, Din), lambda i: (i, 0))]          # streamed + pipelined
    for p in params:                                                # VMEM-resident params
        in_specs.append(pl.BlockSpec(p.shape, lambda i: (0, 0)))

    flops = 2 * B_pad * (Din * Hp + (n_hidden - 1) * Hp * Hp + Hp)
    bytes_accessed = int(x.size) * in_itemsize + resident_bytes + B_pad * 4

    kernel = functools.partial(_mlp_qf_kernel, n_hidden, compute_dtype)
    out = pl.pallas_call(
        kernel,
        out_shape=jax.ShapeDtypeStruct((B_pad, 1), jnp.float32),
        grid=grid,
        in_specs=in_specs,
        out_specs=pl.BlockSpec((BT, 1), lambda i: (i, 0)),
        compiler_params=pltpu.CompilerParams(
            dimension_semantics=("parallel",),      # megacore / v7x dual-TC sharding
            vmem_limit_bytes=vmem_limit,
        ),
        cost_estimate=pl.CostEstimate(
            flops=flops, transcendentals=0, bytes_accessed=bytes_accessed),
    )(*args)
    # .squeeze(-1) from the PyTorch module; drop batch padding (glue, not hot path).
    return out[:B, 0]


def init_params(key, state_dim, action_dim, hidden_dim, n_hidden):
    """nn.Linear-shaped layers [in] + [hidden]*n_hidden + [1], weights as (in, out)."""
    dims = [state_dim + action_dim] + [hidden_dim] * n_hidden + [1]
    weights, biases = [], []
    for i in range(len(dims) - 1):
        key, kw, kb = jax.random.split(key, 3)
        bound = 1.0 / jnp.sqrt(dims[i])
        weights.append(
            jax.random.uniform(kw, (dims[i], dims[i + 1]), jnp.float32, -bound, bound))
        biases.append(
            jax.random.uniform(kb, (dims[i + 1],), jnp.float32, -bound, bound))
    return weights, biases


def reference_forward(state, action, weights, biases, compute_dtype=jnp.bfloat16):
    """Numerics-matched reference: bf16 MXU inputs, f32 accumulation / elementwise."""
    n_hidden = len(weights) - 1
    x = jnp.concatenate([state, action], axis=-1).astype(compute_dtype)
    x32 = None
    for i in range(n_hidden):
        x32 = jax.lax.dot_general(
            x, weights[i].astype(compute_dtype),
            (((1,), (0,)), ((), ())), preferred_element_type=jnp.float32)
        x32 = jnp.maximum(x32 + biases[i].astype(jnp.float32), 0.0)
        x = x32.astype(compute_dtype)
    return jnp.sum(x32 * weights[-1][:, 0], axis=-1) + biases[-1][0]


def reference_forward_f32(state, action, weights, biases):
    """Pure-f32 reference matching the PyTorch module semantics."""
    x = jnp.concatenate([state, action], axis=-1)
    n = len(weights)
    for i, (w, b) in enumerate(zip(weights, biases)):
        x = x @ w + b
        if i < n - 1:
            x = jnp.maximum(x, 0.0)
    return x[:, 0]


if __name__ == "__main__":
    batch = 40          # not a tile multiple -> exercises batch padding + 2-tile grid
    state_dim = 12
    action_dim = 4
    hidden_dim = 32     # < 128 -> exercises hidden-dim lane padding
    n_hidden = 2

    key = jax.random.PRNGKey(0)
    k_s, k_a, k_p = jax.random.split(key, 3)
    state = jax.random.normal(k_s, (batch, state_dim), jnp.float32)
    action = jax.random.normal(k_a, (batch, action_dim), jnp.float32)
    weights, biases = init_params(k_p, state_dim, action_dim, hidden_dim, n_hidden)

    q = mlp_qf_forward(state, action, weights, biases)
    q = jax.block_until_ready(q)
    assert q.shape == (batch,)

    q_ref = reference_forward(state, action, weights, biases)
    assert jnp.allclose(q, q_ref, atol=1e-4, rtol=1e-4), (q, q_ref)

    # Loose check against the pure-f32 module semantics (bf16 input rounding only).
    q_f32 = reference_forward_f32(state, action, weights, biases)
    assert jnp.allclose(q, q_f32, atol=5e-2, rtol=5e-2), (q, q_f32)

    print("KERNEL_OK")
</pallas_src>

<mosaic_0001>
module attributes {stable_mosaic.version = 11 : i64} {
  func.func @_mlp_qf_kernel(%arg0: i32, %arg1: memref<32x16xbf16, #tpu.memory_space<vmem>>, %arg2: memref<16x128xbf16, #tpu.memory_space<vmem>>, %arg3: memref<1x128xf32, #tpu.memory_space<vmem>>, %arg4: memref<128x128xbf16, #tpu.memory_space<vmem>>, %arg5: memref<1x128xf32, #tpu.memory_space<vmem>>, %arg6: memref<1x128xf32, #tpu.memory_space<vmem>>, %arg7: memref<1x1xf32, #tpu.memory_space<vmem>>, %arg8: memref<32x1xf32, #tpu.memory_space<vmem>>) attributes {dimension_semantics = [#tpu.dimension_semantics<parallel>], iteration_bounds = array<i64: 2>, scalar_prefetch = 0 : i64, scratch_operands = 0 : i64, tpu.core_type = #tpu.core_type<tc>, window_params = [{transform_indices = @transform_0, window_bounds = array<i64: 32, 16>}, {pipeline_mode = #tpu.pipeline_mode<synchronous>, transform_indices = @transform_1, window_bounds = array<i64: 16, 128>}, {pipeline_mode = #tpu.pipeline_mode<synchronous>, transform_indices = @transform_2, window_bounds = array<i64: 1, 128>}, {pipeline_mode = #tpu.pipeline_mode<synchronous>, transform_indices = @transform_3, window_bounds = array<i64: 128, 128>}, {pipeline_mode = #tpu.pipeline_mode<synchronous>, transform_indices = @transform_4, window_bounds = array<i64: 1, 128>}, {pipeline_mode = #tpu.pipeline_mode<synchronous>, transform_indices = @transform_5, window_bounds = array<i64: 1, 128>}, {pipeline_mode = #tpu.pipeline_mode<synchronous>, transform_indices = @transform_6, window_bounds = array<i64: 1, 1>}, {transform_indices = @transform_7, window_bounds = array<i64: 32, 1>}]} {
    %c0 = arith.constant 0 : index
    %c0_0 = arith.constant 0 : index
    %0 = vector.load %arg1[%c0, %c0_0] : memref<32x16xbf16, #tpu.memory_space<vmem>>, vector<32x16xbf16>
    %c0_1 = arith.constant 0 : index
    %c0_2 = arith.constant 0 : index
    %1 = vector.load %arg2[%c0_1, %c0_2] : memref<16x128xbf16, #tpu.memory_space<vmem>>, vector<16x128xbf16>
    %cst = arith.constant dense<0.000000e+00> : vector<32x128xf32>
    %2 = tpu.matmul %0, %1, %cst {dimension_numbers = #tpu.dot_dimension_numbers<[1], [0], [0], [1], [0, 0, 1, 1], [], []>} : vector<32x16xbf16>, vector<16x128xbf16>, vector<32x128xf32> -> vector<32x128xf32>
    %c0_3 = arith.constant 0 : index
    %c0_4 = arith.constant 0 : index
    %3 = vector.load %arg3[%c0_3, %c0_4] : memref<1x128xf32, #tpu.memory_space<vmem>>, vector<1x128xf32>
    %4 = vector.broadcast %3 : vector<1x128xf32> to vector<32x128xf32>
    %5 = arith.addf %2, %4 : vector<32x128xf32>
    %cst_5 = arith.constant 0.000000e+00 : f32
    %6 = vector.broadcast %cst_5 : f32 to vector<32x128xf32>
    %7 = arith.maximumf %5, %6 : vector<32x128xf32>
    %c0_6 = arith.constant 0 : index
    %c0_7 = arith.constant 0 : index
    %8 = vector.load %arg4[%c0_6, %c0_7] : memref<128x128xbf16, #tpu.memory_space<vmem>>, vector<128x128xbf16>
    %c0_8 = arith.constant 0 : index
    %c0_9 = arith.constant 0 : index
    %9 = vector.load %arg5[%c0_8, %c0_9] : memref<1x128xf32, #tpu.memory_space<vmem>>, vector<1x128xf32>
    %10 = arith.truncf %7 : vector<32x128xf32> to vector<32x128xbf16>
    %cst_10 = arith.constant dense<0.000000e+00> : vector<32x128xf32>
    %11 = tpu.matmul %10, %8, %cst_10 {dimension_numbers = #tpu.dot_dimension_numbers<[1], [0], [0], [1], [0, 0, 1, 1], [], []>} : vector<32x128xbf16>, vector<128x128xbf16>, vector<32x128xf32> -> vector<32x128xf32>
    %12 = vector.broadcast %9 : vector<1x128xf32> to vector<32x128xf32>
    %13 = arith.addf %11, %12 : vector<32x128xf32>
    %cst_11 = arith.constant 0.000000e+00 : f32
    %14 = vector.broadcast %cst_11 : f32 to vector<32x128xf32>
    %15 = arith.maximumf %13, %14 : vector<32x128xf32>
    %c0_12 = arith.constant 0 : index
    %c0_13 = arith.constant 0 : index
    %16 = vector.load %arg6[%c0_12, %c0_13] : memref<1x128xf32, #tpu.memory_space<vmem>>, vector<1x128xf32>
    %17 = vector.broadcast %16 : vector<1x128xf32> to vector<32x128xf32>
    %18 = arith.mulf %15, %17 : vector<32x128xf32>
    %cst_14 = arith.constant dense<0.000000e+00> : vector<32xf32>
    %19 = vector.multi_reduction <add>, %18, %cst_14 [1] : vector<32x128xf32> to vector<32xf32>
    %20 = vector.shape_cast %19 : vector<32xf32> to vector<32x1xf32>
    %c0_15 = arith.constant 0 : index
    %c0_16 = arith.constant 0 : index
    %21 = vector.load %arg7[%c0_15, %c0_16] : memref<1x1xf32, #tpu.memory_space<vmem>>, vector<1x1xf32>
    %22 = vector.broadcast %21 : vector<1x1xf32> to vector<32x1xf32>
    %23 = arith.addf %20, %22 : vector<32x1xf32>
    %c0_17 = arith.constant 0 : index
    %c0_18 = arith.constant 0 : index
    %24 = vector.load %arg8[%c0_17, %c0_18] : memref<32x1xf32, #tpu.memory_space<vmem>>, vector<32x1xf32>
    tpu.vector_store %arg8[%c0_17, %c0_18], %23 {strides = array<i32>} : memref<32x1xf32, #tpu.memory_space<vmem>>, vector<32x1xf32>,
    return
  }
  func.func @transform_0(%arg0: i32) -> (i32, i32) {
    %c0_i32 = arith.constant 0 : i32
    %c0_i32_0 = arith.constant 0 : i32
    return %arg0, %c0_i32 : i32, i32
  }
  func.func @transform_1(%arg0: i32) -> (i32, i32) {
    %c0_i32 = arith.constant 0 : i32
    %c0_i32_0 = arith.constant 0 : i32
    %c0_i32_1 = arith.constant 0 : i32
    return %c0_i32, %c0_i32_0 : i32, i32
  }
  func.func @transform_2(%arg0: i32) -> (i32, i32) {
    %c0_i32 = arith.constant 0 : i32
    %c0_i32_0 = arith.constant 0 : i32
    %c0_i32_1 = arith.constant 0 : i32
    return %c0_i32, %c0_i32_0 : i32, i32
  }
  func.func @transform_3(%arg0: i32) -> (i32, i32) {
    %c0_i32 = arith.constant 0 : i32
    %c0_i32_0 = arith.constant 0 : i32
    %c0_i32_1 = arith.constant 0 : i32
    return %c0_i32, %c0_i32_0 : i32, i32
  }
  func.func @transform_4(%arg0: i32) -> (i32, i32) {
    %c0_i32 = arith.constant 0 : i32
    %c0_i32_0 = arith.constant 0 : i32
    %c0_i32_1 = arith.constant 0 : i32
    return %c0_i32, %c0_i32_0 : i32, i32
  }
  func.func @transform_5(%arg0: i32) -> (i32, i32) {
    %c0_i32 = arith.constant 0 : i32
    %c0_i32_0 = arith.constant 0 : i32
    %c0_i32_1 = arith.constant 0 : i32
    return %c0_i32, %c0_i32_0 : i32, i32
  }
  func.func @transform_6(%arg0: i32) -> (i32, i32) {
    %c0_i32 = arith.constant 0 : i32
    %c0_i32_0 = arith.constant 0 : i32
    %c0_i32_1 = arith.constant 0 : i32
    return %c0_i32, %c0_i32_0 : i32, i32
  }
  func.func @transform_7(%arg0: i32) -> (i32, i32) {
    %c0_i32 = arith.constant 0 : i32
    %c0_i32_0 = arith.constant 0 : i32
    return %arg0, %c0_i32 : i32, i32
  }
}

</mosaic_0001>

<llo_original>
// kernel: tpu_custom_call.1
$region0: #{tpu_custom_call.1}
  #allocation0 [shape = 'u32[]', space=smem, size = 0x4, offset = 0x4, fixed_abs, tag = 'smem constant byte address 0x4 - core index']
  #allocation1 [shape = 'u32[72,128]{1,0:T(1,128)}', space=vmem, size = 0x9000, scoped, tag = 'internal scratch']
  #allocation2 [shape = 'f32[1,1]{1,0:T(1,128)S(1)}', space=vmem, size = 0x200, scoped, tag = 'scoped memory for tpu_custom_call.1']
  %s0 = inlined_call_operand.vmem [shape: bf16[64,16], index: 0, kind: input, shape index: {}]
  %s1 = inlined_call_operand.vmem [shape: bf16[16,128], index: 1, kind: input, shape index: {}]
  %s2 = inlined_call_operand.vmem [shape: f32[1,128], index: 2, kind: input, shape index: {}]
  %s3 = inlined_call_operand.hbm [shape: bf16[128,128], index: 3, kind: input, shape index: {}]
  %s4 = inlined_call_operand.vmem [shape: f32[1,128], index: 4, kind: input, shape index: {}]
  %s5 = inlined_call_operand.vmem [shape: f32[1,128], index: 5, kind: input, shape index: {}]
  %s6 = inlined_call_operand.<no memory space> [shape: f32[1,1], index: 6, kind: input, shape index: {}]
  %s7 = inlined_call_operand.vmem [shape: f32[64,1], index: 7, kind: output, shape index: {}]
  %s8 = sld [smem:[#allocation0]]
  $region65: #{tpu_custom_call.1} parent=0
    _
  %s10 = ssub.s32 1, %s8
  %s11 = scalar_select 0, %s10, %s8
  %v12 = vstv %s6
  %13 = vst [vmem:[#allocation2] sm:$0x1] %v12
  $region1: #{tpu_custom_call.1} parent=0
    #allocation3 [shape = 'u8[32768]{0}', space=vmem, size = 0x8000, scoped, tag = 'input window, operand 3, single buffered']
    #allocation4 [shape = 's32[2]{0}', space=sflag, size = 0x8, scoped, tag = 'scoped memory for tpu_custom_call.1']
    %14 = vsyncpa [#allocation4], 0
    loop: start=0, step=1, limit=4
    $region2: #{tpu_custom_call.1} parent=1 // loop_pre_header
      _
    $region3: #{tpu_custom_call.1} parent=1 // loop_header
      %s16 = sphi 0, %s20
      %p17 = scmp.ge.s32.totalorder %s16, 4
      %s26 = sphi 0, %s28
      %s29 = sphi 0, %s26
      %s30 = sphi 0, %s29
      %s46 = sphi 0, %s30
      %s50 = sphi 0, %s50
      %s52 = sphi 0, %s50
      %s53 = sphi 0, %s52
      %s67 = sphi 0, %s53
      %s71 = sphi 0, %s71
      %s73 = sphi 0, %s71
      %s74 = sphi 0, %s73
      %s88 = sphi 0, %s74
      %s92 = sphi 0, %s92
      %s94 = sphi 0, %s92
      %s95 = sphi 0, %s94
      %s109 = sphi 0, %s95
      %s113 = sphi 0, %s113
      %s115 = sphi 0, %s113
      %s116 = sphi 0, %s115
      %s130 = sphi 0, %s116
      %s134 = sphi 0, %s134
      %s136 = sphi 0, %s134
      %s137 = sphi 0, %s136
      %s151 = sphi 0, %s137
      %s155 = sphi 0, %s155
      %s157 = sphi 0, %s155
      %s158 = sphi 0, %s157
      %s172 = sphi 0, %s158
      %s178 = sphi 0, %s180
      %s181 = sphi 0, %s178
      %s182 = sphi 0, %s181
      %s198 = sphi 0, %s182
    $region4: #{tpu_custom_call.1} parent=1 // loop_header_branch
      %19 = sbr.rel (%p17) target = $region8
    $region5: #{tpu_custom_call.1} parent=1 // loop_body
      %s21 = ssub.s32 %s16, 1
      %s22 = ssub.s32 %s16, 2
      %s23 = sadd.s32 %s16, 1
      %s24 = ssub.s32 %s16, %s23
      %p25 = scmp.eq.s32.totalorder %s24, 0
      %s27 = sadd.s32 %s26, 1
      %s28 = scalar_select %p25, %s26, %s27
      %p31 = pneg %p25
      %p32 = scmp.eq.s32.totalorder %s16, 1
      %p33 = por %p31, %p32
      %p34 = scmp.ne.s32.totalorder %s26, %s29
      %p35 = scmp.eq.s32.totalorder %s16, 0
      %p36 = por %p34, %p35
      %p37 = scmp.ne.s32.totalorder %s26, %s29
      %p38 = scmp.eq.s32.totalorder %s21, 1
      %p39 = por %p37, %p38
      %p40 = scmp.ne.s32.totalorder %s29, %s30
      %p41 = scmp.eq.s32.totalorder %s21, 0
      %p42 = por %p40, %p41
      %p43 = scmp.ne.s32.totalorder %s29, %s30
      %p44 = scmp.eq.s32.totalorder %s22, 1
      %p45 = por %p43, %p44
      %p47 = scmp.ne.s32.totalorder %s30, %s46
      %p48 = scmp.eq.s32.totalorder %s22, 0
      %p49 = por %p47, %p48
      %s51 = sadd.s32 %s50, 1
      %p54 = scmp.eq.s32.totalorder %s16, 1
      %p55 = scmp.ne.s32.totalorder %s50, %s52
      %p56 = scmp.eq.s32.totalorder %s16, 0
      %p57 = por %p55, %p56
      %p58 = scmp.ne.s32.totalorder %s50, %s52
      %p59 = scmp.eq.s32.totalorder %s21, 1
      %p60 = por %p58, %p59
      %p61 = scmp.ne.s32.totalorder %s52, %s53
      %p62 = scmp.eq.s32.totalorder %s21, 0
      %p63 = por %p61, %p62
      %p64 = scmp.ne.s32.totalorder %s52, %s53
      %p65 = scmp.eq.s32.totalorder %s22, 1
      %p66 = por %p64, %p65
      %p68 = scmp.ne.s32.totalorder %s53, %s67
      %p69 = scmp.eq.s32.totalorder %s22, 0
      %p70 = por %p68, %p69
      %s72 = sadd.s32 %s71, 1
      %p75 = scmp.eq.s32.totalorder %s16, 1
      %p76 = scmp.ne.s32.totalorder %s71, %s73
      %p77 = scmp.eq.s32.totalorder %s16, 0
      %p78 = por %p76, %p77
      %p79 = scmp.ne.s32.totalorder %s71, %s73
      %p80 = scmp.eq.s32.totalorder %s21, 1
      %p81 = por %p79, %p80
      %p82 = scmp.ne.s32.totalorder %s73, %s74
      %p83 = scmp.eq.s32.totalorder %s21, 0
      %p84 = por %p82, %p83
      %p85 = scmp.ne.s32.totalorder %s73, %s74
      %p86 = scmp.eq.s32.totalorder %s22, 1
      %p87 = por %p85, %p86
      %p89 = scmp.ne.s32.totalorder %s74, %s88
      %p90 = scmp.eq.s32.totalorder %s22, 0
      %p91 = por %p89, %p90
      %s93 = sadd.s32 %s92, 1
      %p96 = scmp.eq.s32.totalorder %s16, 1
      %p97 = scmp.ne.s32.totalorder %s92, %s94
      %p98 = scmp.eq.s32.totalorder %s16, 0
      %p99 = por %p97, %p98
      %p100 = scmp.ne.s32.totalorder %s92, %s94
      %p101 = scmp.eq.s32.totalorder %s21, 1
      %p102 = por %p100, %p101
      %p103 = scmp.ne.s32.totalorder %s94, %s95
      %p104 = scmp.eq.s32.totalorder %s21, 0
      %p105 = por %p103, %p104
      %p106 = scmp.ne.s32.totalorder %s94, %s95
      %p107 = scmp.eq.s32.totalorder %s22, 1
      %p108 = por %p106, %p107
      %p110 = scmp.ne.s32.totalorder %s95, %s109
      %p111 = scmp.eq.s32.totalorder %s22, 0
      %p112 = por %p110, %p111
      %s114 = sadd.s32 %s113, 1
      %p117 = scmp.eq.s32.totalorder %s16, 1
      %p118 = scmp.ne.s32.totalorder %s113, %s115
      %p119 = scmp.eq.s32.totalorder %s16, 0
      %p120 = por %p118, %p119
      %p121 = scmp.ne.s32.totalorder %s113, %s115
      %p122 = scmp.eq.s32.totalorder %s21, 1
      %p123 = por %p121, %p122
      %p124 = scmp.ne.s32.totalorder %s115, %s116
      %p125 = scmp.eq.s32.totalorder %s21, 0
      %p126 = por %p124, %p125
      %p127 = scmp.ne.s32.totalorder %s115, %s116
      %p128 = scmp.eq.s32.totalorder %s22, 1
      %p129 = por %p127, %p128
      %p131 = scmp.ne.s32.totalorder %s116, %s130
      %p132 = scmp.eq.s32.totalorder %s22, 0
      %p133 = por %p131, %p132
      %s135 = sadd.s32 %s134, 1
      %p138 = scmp.eq.s32.totalorder %s16, 1
      %p139 = scmp.ne.s32.totalorder %s134, %s136
      %p140 = scmp.eq.s32.totalorder %s16, 0
      %p141 = por %p139, %p140
      %p142 = scmp.ne.s32.totalorder %s134, %s136
      %p143 = scmp.eq.s32.totalorder %s21, 1
      %p144 = por %p142, %p143
      %p145 = scmp.ne.s32.totalorder %s136, %s137
      %p146 = scmp.eq.s32.totalorder %s21, 0
      %p147 = por %p145, %p146
      %p148 = scmp.ne.s32.totalorder %s136, %s137
      %p149 = scmp.eq.s32.totalorder %s22, 1
      %p150 = por %p148, %p149
      %p152 = scmp.ne.s32.totalorder %s137, %s151
      %p153 = scmp.eq.s32.totalorder %s22, 0
      %p154 = por %p152, %p153
      %s156 = sadd.s32 %s155, 1
      %p159 = scmp.eq.s32.totalorder %s16, 1
      %p160 = scmp.ne.s32.totalorder %s155, %s157
      %p161 = scmp.eq.s32.totalorder %s16, 0
      %p162 = por %p160, %p161
      %p163 = scmp.ne.s32.totalorder %s155, %s157
      %p164 = scmp.eq.s32.totalorder %s21, 1
      %p165 = por %p163, %p164
      %p166 = scmp.ne.s32.totalorder %s157, %s158
      %p167 = scmp.eq.s32.totalorder %s21, 0
      %p168 = por %p166, %p167
      %p169 = scmp.ne.s32.totalorder %s157, %s158
      %p170 = scmp.eq.s32.totalorder %s22, 1
      %p171 = por %p169, %p170
      %p173 = scmp.ne.s32.totalorder %s158, %s172
      %p174 = scmp.eq.s32.totalorder %s22, 0
      %p175 = por %p173, %p174
      %s176 = ssub.s32 %s16, %s23
      %p177 = scmp.eq.s32.totalorder %s176, 0
      %s179 = sadd.s32 %s178, 1
      %s180 = scalar_select %p177, %s178, %s179
      %p183 = pneg %p177
      %p184 = scmp.eq.s32.totalorder %s16, 1
      %p185 = por %p183, %p184
      %p186 = scmp.ne.s32.totalorder %s178, %s181
      %p187 = scmp.eq.s32.totalorder %s16, 0
      %p188 = por %p186, %p187
      %p189 = scmp.ne.s32.totalorder %s178, %s181
      %p190 = scmp.eq.s32.totalorder %s21, 1
      %p191 = por %p189, %p190
      %p192 = scmp.ne.s32.totalorder %s181, %s182
      %p193 = scmp.eq.s32.totalorder %s21, 0
      %p194 = por %p192, %p193
      %p195 = scmp.ne.s32.totalorder %s181, %s182
      %p196 = scmp.eq.s32.totalorder %s22, 1
      %p197 = por %p195, %p196
      %p199 = scmp.ne.s32.totalorder %s182, %s198
      %p200 = scmp.eq.s32.totalorder %s22, 0
      %p201 = por %p199, %p200
      %p202 = scmp.le.s32.totalorder 1, %s16
      %p203 = scmp.lt.s32.totalorder %s16, 3
      %p204 = pnand %p202, %p203
      %p205 = pneg %p204
      // Predicated region
      $region9: #{tpu_custom_call.1} parent=5 // pred_check
        _
      $region10: #{tpu_custom_call.1} parent=5 // pred_check_branch
        %207 = sbr.rel (%p204) target = $region12
      $region11: #{tpu_custom_call.1} parent=5 // pred_region
        %s208 = ssub.s32 %s16, 1
        // Predicated region
        $region13: #{tpu_custom_call.1} parent=11 // pred_check
          %p209 = pneg %p63
        $region14: #{tpu_custom_call.1} parent=11 // pred_check_branch
          %211 = sbr.rel (%p209) target = $region16
        $region15: #{tpu_custom_call.1} parent=11 // pred_region
          _
        $region16: #{tpu_custom_call.1} parent=11 // pred_fallthru
          _
        // Predicated region
        $region17: #{tpu_custom_call.1} parent=11 // pred_check
          %p212 = pneg %p84
        $region18: #{tpu_custom_call.1} parent=11 // pred_check_branch
          %214 = sbr.rel (%p212) target = $region20
        $region19: #{tpu_custom_call.1} parent=11 // pred_region
          _
        $region20: #{tpu_custom_call.1} parent=11 // pred_fallthru
          _
        // Predicated region
        $region21: #{tpu_custom_call.1} parent=11 // pred_check
          %p215 = pneg %p105
        $region22: #{tpu_custom_call.1} parent=11 // pred_check_branch
          %217 = sbr.rel (%p215) target = $region24
        $region23: #{tpu_custom_call.1} parent=11 // pred_region
          %219 = vsyncadd [#allocation4], 0
          %s220 = sshll.u32 %s3, 4
          %s221 = int_to_ptr.hbm [resolvable:$true] %s220
          %s222 = sshll.u32 [#allocation3], 4
          %s223 = int_to_ptr.vmem [resolvable:$true] %s222
          %228 = dma.hbm_to_vmem [thread:$0]  %s221, 1024, %s223, [#allocation4], 64, 64, 4
        $region24: #{tpu_custom_call.1} parent=11 // pred_fallthru
          _
        // Predicated region
        $region25: #{tpu_custom_call.1} parent=11 // pred_check
          %p229 = pneg %p126
        $region26: #{tpu_custom_call.1} parent=11 // pred_check_branch
          %231 = sbr.rel (%p229) target = $region28
        $region27: #{tpu_custom_call.1} parent=11 // pred_region
          _
        $region28: #{tpu_custom_call.1} parent=11 // pred_fallthru
          _
        // Predicated region
        $region29: #{tpu_custom_call.1} parent=11 // pred_check
          %p232 = pneg %p147
        $region30: #{tpu_custom_call.1} parent=11 // pred_check_branch
          %234 = sbr.rel (%p232) target = $region32
        $region31: #{tpu_custom_call.1} parent=11 // pred_region
          _
        $region32: #{tpu_custom_call.1} parent=11 // pred_fallthru
          _
        // Predicated region
        $region33: #{tpu_custom_call.1} parent=11 // pred_check
          %p235 = pneg %p168
        $region34: #{tpu_custom_call.1} parent=11 // pred_check_branch
          %237 = sbr.rel (%p235) target = $region36
        $region35: #{tpu_custom_call.1} parent=11 // pred_region
          _
        $region36: #{tpu_custom_call.1} parent=11 // pred_fallthru
          _
      $region12: #{tpu_custom_call.1} parent=5 // pred_fallthru
        _
      %p238 = scmp.lt.s32.totalorder %s16, 2
      // Predicated region
      $region37: #{tpu_custom_call.1} parent=5 // pred_check
        %p239 = pneg %p238
      $region38: #{tpu_custom_call.1} parent=5 // pred_check_branch
        %241 = sbr.rel (%p239) target = $region40
      $region39: #{tpu_custom_call.1} parent=5 // pred_region
        // Predicated region
        $region41: #{tpu_custom_call.1} parent=39 // pred_check
          %p242 = pneg %p36
        $region42: #{tpu_custom_call.1} parent=39 // pred_check_branch
          %244 = sbr.rel (%p242) target = $region44
        $region43: #{tpu_custom_call.1} parent=39 // pred_region
          %s245 = smul.u32 4, %s16
          %p246 = scmp.lt.s32.totalorder %s245, 7
          %s247 = scalar_select %p246, %s245, 7
          %s248 = smul.addr %s247, 4
          %s249 = scalar_lea.vmem %s0, %s248
          %s250 = smul.u32 4, %s16
        $region44: #{tpu_custom_call.1} parent=39 // pred_fallthru
          _
      $region40: #{tpu_custom_call.1} parent=5 // pred_fallthru
        _
      %p251 = scmp.le.s32.totalorder 1, %s16
      %p252 = scmp.lt.s32.totalorder %s16, 3
      %p253 = pnand %p251, %p252
      %p254 = pneg %p253
      // Predicated region
      $region45: #{tpu_custom_call.1} parent=5 // pred_check
        _
      $region46: #{tpu_custom_call.1} parent=5 // pred_check_branch
        %256 = sbr.rel (%p253) target = $region48
      $region47: #{tpu_custom_call.1} parent=5 // pred_region
        %s257 = ssub.s32 %s16, 1
        // Predicated region
        $region49: #{tpu_custom_call.1} parent=47 // pred_check
          %p258 = pneg %p105
        $region50: #{tpu_custom_call.1} parent=47 // pred_check_branch
          %260 = sbr.rel (%p258) target = $region52
        $region51: #{tpu_custom_call.1} parent=47 // pred_region
          %262 = dma.done [#allocation4], 1024
        $region52: #{tpu_custom_call.1} parent=47 // pred_fallthru
          _
        %s263 = smul.u32 4, %s21
        %p264 = scmp.lt.s32.totalorder %s263, 7
        %s265 = scalar_select %p264, %s263, 7
        %s266 = smul.addr %s265, 4
        %s267 = scalar_lea.vmem %s0, %s266
        %p268 = pneg %p42
        %p269 = pneg %p39
        %p270 = pneg %p63
        %p271 = pneg %p60
        %p272 = pneg %p84
        %p273 = pneg %p81
        %p274 = pneg %p105
        %p275 = pneg %p102
        %p276 = pneg %p126
        %p277 = pneg %p123
        %p278 = pneg %p147
        %p279 = pneg %p144
        %p280 = pneg %p168
        %p281 = pneg %p165
        %p282 = pneg %p194
        %p283 = pneg %p191
        %s284 = smul.u32 4, %s21
        %p285 = scmp.lt.s32.totalorder %s284, 7
        %s286 = scalar_select %p285, %s284, 7
        %s287 = smul.addr %s286, 8
        %s288 = scalar_lea.vmem %s7, %s287
        %s289 = smul.u32 4, %s21
        %p290 = scmp.lt.s32.totalorder %s289, 7
        %s291 = scalar_select %p290, %s289, 7
        %s292 = smul.addr %s291, 4
        %s293 = scalar_lea.vmem %s0, %s292
        %s294 = smul.u32 4, %s21
        %s295 = smul.u32 4, %s21
        %p296 = scmp.lt.s32.totalorder %s295, 7
        %s297 = scalar_select %p296, %s295, 7
        %s298 = smul.addr %s297, 8
        %s299 = scalar_lea.vmem %s7, %s298
        %s300 = smul.u32 4, %s21
        %v302 = vld [vmem:[%s293] sm:$0xf]
        %v303 = vld [vmem:[%s293 + $0x4] sm:$0xf]
        %v304 = vld [vmem:[%s293 + $0x8] sm:$0xf]
        %v305 = vld [vmem:[%s293 + $0xc] sm:$0xf]
        %v306 = vld [vmem:[%s1] sm:$0xf]
        %v307 = vld [vmem:[%s1 + $0x4] sm:$0xf]
        %v308 = vld [vmem:[%s2] sm:$0x1]
        %v310 = vperm.slane %v308, 0
        %v316 = vunpack.c.l.b16 %v302
        %v317 = vunpack.c.l.b16 %v303
        %v318 = vunpack.c.l.b16 %v304
        %v319 = vunpack.c.l.b16 %v305
        %v320 = vpack.c.b16 %v317, %v316
        %v321 = vpack.c.b16 %v319, %v318
        %v324 = vunpack.c.l.b16 %v306
        %v325 = vunpack.c.l.b16 %v307
        %v326 = vpack.c.b16 %v325, %v324
        %vm328 = vcmask 130048
        %v330 = vsel %vm328, %v320, 0
        %v333 = vsel %vm328, %v321, 0
        %335 = vmatpush.bf16.msra.mxu0 0
        %336 = vmatpush.bf16.msra.mxu0 0
        %337 = vmatpush.bf16.msra.mxu0 0
        %338 = vmatpush.bf16.msra.mxu0 0
        %339 = vmatpush.bf16.msra.mxu0 0
        %340 = vmatpush.bf16.msra.mxu0 0
        %341 = vmatpush.bf16.msra.mxu0 0
        %342 = vmatpush.bf16.msra.mxu0 %v326
        %343 = vmatmul.bf16.gmra.mxu0 %v330
        %v344 = vpop.f32.mrf.mxu0
        %v345 = vadd.f32 %v310, %v344
        %v346 = vpop.f32.mrf.mxu0
        %v347 = vadd.f32 %v310, %v346
        %348 = vmatmul.bf16.gmra.mxu0 %v333
        %v349 = vpop.f32.mrf.mxu0
        %v350 = vadd.f32 %v310, %v349
        %v351 = vpop.f32.mrf.mxu0
        %v352 = vadd.f32 %v310, %v351
        %353 = vdwg.mxu0
        %v354 = vmax.f32 %v345, 0.0
        %v355 = vmax.f32 %v347, 0.0
        %v356 = vmax.f32 %v350, 0.0
        %v357 = vmax.f32 %v352, 0.0
        %v358 = vld [vmem:[#allocation3] sm:$0xf]
        %v359 = vld [vmem:[#allocation3 + $0x4] sm:$0xf]
        %v360 = vld [vmem:[#allocation3 + $0x8] sm:$0xf]
        %v361 = vld [vmem:[#allocation3 + $0xc] sm:$0xf]
        %v362 = vld [vmem:[#allocation3 + $0x10] sm:$0xf]
        %v363 = vld [vmem:[#allocation3 + $0x14] sm:$0xf]
        %v364 = vld [vmem:[#allocation3 + $0x18] sm:$0xf]
        %v365 = vld [vmem:[#allocation3 + $0x1c] sm:$0xf]
        %v366 = vld [vmem:[#allocation3 + $0x20] sm:$0xf]
        %v367 = vld [vmem:[#allocation3 + $0x24] sm:$0xf]
        %v368 = vld [vmem:[#allocation3 + $0x28] sm:$0xf]
        %v369 = vld [vmem:[#allocation3 + $0x2c] sm:$0xf]
        %v370 = vld [vmem:[#allocation3 + $0x30] sm:$0xf]
        %v371 = vld [vmem:[#allocation3 + $0x34] sm:$0xf]
        %v372 = vld [vmem:[#allocation3 + $0x38] sm:$0xf]
        %v373 = vld [vmem:[#allocation3 + $0x3c] sm:$0xf]
        %v374 = vld [vmem:[%s4] sm:$0x1]
        %v375 = vpack.c.bf16 %v355, %v354
        %v376 = vpack.c.bf16 %v357, %v356
        %v378 = vperm.slane %v374, 0
        %v396 = vunpack.c.l.b16 %v358
        %v397 = vunpack.c.l.b16 %v359
        %v398 = vunpack.c.l.b16 %v360
        %v399 = vunpack.c.l.b16 %v361
        %v400 = vunpack.c.l.b16 %v362
        %v401 = vunpack.c.l.b16 %v363
        %v402 = vunpack.c.l.b16 %v364
        %v403 = vunpack.c.l.b16 %v365
        %v404 = vunpack.c.l.b16 %v366
        %v405 = vunpack.c.l.b16 %v367
        %v406 = vunpack.c.l.b16 %v368
        %v407 = vunpack.c.l.b16 %v369
        %v408 = vunpack.c.l.b16 %v370
        %v409 = vunpack.c.l.b16 %v371
        %v410 = vunpack.c.l.b16 %v372
        %v411 = vunpack.c.l.b16 %v373
        %v412 = vpack.c.b16 %v397, %v396
        %v413 = vpack.c.b16 %v399, %v398
        %v414 = vpack.c.b16 %v401, %v400
        %v415 = vpack.c.b16 %v403, %v402
        %v416 = vpack.c.b16 %v405, %v404
        %v417 = vpack.c.b16 %v407, %v406
        %v418 = vpack.c.b16 %v409, %v408
        %v419 = vpack.c.b16 %v411, %v410
        %428 = vmatpush.bf16.msra.mxu0 %v419
        %429 = vmatpush.bf16.msra.mxu0 %v418
        %430 = vmatpush.bf16.msra.mxu0 %v417
        %431 = vmatpush.bf16.msra.mxu0 %v416
        %432 = vmatpush.bf16.msra.mxu0 %v415
        %433 = vmatpush.bf16.msra.mxu0 %v414
        %434 = vmatpush.bf16.msra.mxu0 %v413
        %435 = vmatpush.bf16.msra.mxu0 %v412
        %436 = vmatmul.bf16.gmra.mxu0 %v375
        %v437 = vpop.f32.mrf.mxu0
        %v438 = vadd.f32 %v378, %v437
        %v439 = vpop.f32.mrf.mxu0
        %v440 = vadd.f32 %v378, %v439
        %441 = vmatmul.bf16.gmra.mxu0 %v376
        %v442 = vpop.f32.mrf.mxu0
        %v443 = vadd.f32 %v378, %v442
        %v444 = vpop.f32.mrf.mxu0
        %v445 = vadd.f32 %v378, %v444
        %446 = vdwg.mxu0
        %v447 = vmax.f32 %v438, 0.0
        %v448 = vmax.f32 %v440, 0.0
        %v449 = vmax.f32 %v443, 0.0
        %v450 = vmax.f32 %v445, 0.0
        %v451 = vld [vmem:[%s5] sm:$0x1]
        %v453 = vperm.slane %v451, 0
        %v455 = vmul.f32 %v447, %v453
        %v456 = vmul.f32 %v448, %v453
        %v457 = vmul.f32 %v449, %v453
        %v458 = vmul.f32 %v450, %v453
        %459 = vadd.xlane.f32.xlu0 %v455
        %v460 = vpop.xlane.xlu0 %459
        %461 = vadd.xlane.f32.xlu0 %v456
        %v462 = vpop.xlane.xlu0 %461
        %463 = vadd.xlane.f32.xlu0 %v457
        %v464 = vpop.xlane.xlu0 %463
        %465 = vadd.xlane.f32.xlu0 %v458
        %v466 = vpop.xlane.xlu0 %465
        %v467 = vld [vmem:[#allocation2] sm:$0x1]
        %v469 = vperm.slane %v467, 0
        %v471 = vadd.f32 %v460, %v469
        %v472 = vadd.f32 %v462, %v469
        %v473 = vadd.f32 %v464, %v469
        %v474 = vadd.f32 %v466, %v469
        %vm475 = vcmask 7168
        %476 = vst.msk [vmem:[%s299] sm:$0xff] %vm475, %v471
        %477 = vst.msk [vmem:[%s299 + $0x8] sm:$0xff] %vm475, %v472
        %478 = vst.msk [vmem:[%s299 + $0x10] sm:$0xff] %vm475, %v473
        %479 = vst.msk [vmem:[%s299 + $0x18] sm:$0xff] %vm475, %v474
        %s480 = smul.u32 4, %s21
        %p481 = scmp.lt.s32.totalorder %s480, 7
        %s482 = scalar_select %p481, %s480, 7
        %s483 = smul.addr %s482, 8
        %s484 = scalar_lea.vmem %s7, %s483
        // Predicated region
        $region53: #{tpu_custom_call.1} parent=47 // pred_check
          %p485 = pneg %p191
        $region54: #{tpu_custom_call.1} parent=47 // pred_check_branch
          %487 = sbr.rel (%p485) target = $region56
        $region55: #{tpu_custom_call.1} parent=47 // pred_region
          %s488 = smul.u32 4, %s21
        $region56: #{tpu_custom_call.1} parent=47 // pred_fallthru
          _
      $region48: #{tpu_custom_call.1} parent=5 // pred_fallthru
        _
      %p489 = scmp.le.s32.totalorder 2, %s16
      // Predicated region
      $region57: #{tpu_custom_call.1} parent=5 // pred_check
        %p490 = pneg %p489
      $region58: #{tpu_custom_call.1} parent=5 // pred_check_branch
        %492 = sbr.rel (%p490) target = $region60
      $region59: #{tpu_custom_call.1} parent=5 // pred_region
        %s493 = ssub.s32 %s16, 2
        // Predicated region
        $region61: #{tpu_custom_call.1} parent=59 // pred_check
          %p494 = pneg %p197
        $region62: #{tpu_custom_call.1} parent=59 // pred_check_branch
          %496 = sbr.rel (%p494) target = $region64
        $region63: #{tpu_custom_call.1} parent=59 // pred_region
          %s497 = smul.u32 4, %s22
          %p498 = scmp.lt.s32.totalorder %s497, 7
          %s499 = scalar_select %p498, %s497, 7
          %s500 = smul.addr %s499, 8
          %s501 = scalar_lea.vmem %s7, %s500
        $region64: #{tpu_custom_call.1} parent=59 // pred_fallthru
          _
      $region60: #{tpu_custom_call.1} parent=5 // pred_fallthru
        _
    $region6: #{tpu_custom_call.1} parent=1 // loop_footer
      %s20 = sadd.s32 1, %s16
    $region7: #{tpu_custom_call.1} parent=1 // loop_footer_branch
      %15 = sbr.rel target = $region3
    $region8: #{tpu_custom_call.1} parent=1 // loop_exit
      _
    %502 = vsyncpa [#allocation4], 1
    %s503 = scalar_lea.sflag [#allocation4], 1
    %504 = vsyncpa %s503, 1

</llo_original>
